<compile_context>
chip_gen: v7x
topology: tpu7x:2x2x1
jax: 0.10.0
libtpu: 0.0.40
codegen_flags: <defaults>
</compile_context>

<pallas_src>
import functools

import jax
import jax.numpy as jnp
from jax.experimental import pallas as pl
from jax.experimental.pallas import tpu as pltpu


LEAKY_SLOPE = 0.01     # F.leaky_relu default
LN_EPS = 1e-5          # nn.LayerNorm default
MAX_TN = 16384         # max action rows (lane axis) per grid step; multiple of 128


def _round_up(x, m):
    return (x + m - 1) // m * m


def _mlp_kernel(sstat_ref, a_ref, v_ref,
                w1a_ref, s1_ref, b1_ref, w2_ref, b2_ref, w3_ref, b3_ref,
                o_ref, *, d_total):
    """One (batch, N-tile) step.

    sstat_ref: SMEM [B, 2]        (per-batch sum(state), sum(state^2))
    a_ref:     [1, A, TN] bf16    (action features, features on sublanes)
    v_ref:     [1, H, 1]  f32     (per-batch W1s' @ state)
    w1a_ref:[H,A] bf16  s1_ref/b1_ref/b2_ref/w3_ref:[H,1] f32  w2_ref:[H,H] bf16  b3_ref:[1,1]
    o_ref:     [1, 1, TN] f32     (lane-dense Q values for this tile)
    """
    b = pl.program_id(0)
    inv_d = 1.0 / d_total

    a = a_ref[0].astype(jnp.float32)                       # [A, TN]
    ssum = sstat_ref[b, 0]                                 # scalar
    ssq = sstat_ref[b, 1]                                  # scalar

    # LayerNorm statistics over the full (state + action) feature vector.
    asum = jnp.sum(a, axis=0, keepdims=True)               # [1, TN]
    asq = jnp.sum(a * a, axis=0, keepdims=True)            # [1, TN]
    mean = (asum + ssum) * inv_d
    var = (asq + ssq) * inv_d - mean * mean
    inv = jax.lax.rsqrt(var + LN_EPS)                      # [1, TN]
    mu = mean * inv                                        # [1, TN]

    # Layer 1 (LN affine already folded into W1'/b1').  Action part on the MXU;
    # the broadcast-state part is the rank-1 identity  W1s'@state_hat = v*inv - s1*mu.
    a_hat = ((a - mean) * inv).astype(jnp.bfloat16)        # [A, TN]
    h = jnp.dot(w1a_ref[...], a_hat, preferred_element_type=jnp.float32)   # [H, TN]
    h = h + v_ref[0] * inv - s1_ref[...] * mu + b1_ref[...]
    h = jnp.maximum(h, LEAKY_SLOPE * h)
    # TODO(synk): if VALU-bound, the rank-1 terms + bias could move onto the MXU via an
    # augmented per-batch [H, A+3] weight and a sublane-concat RHS; kept on the VPU for
    # lowering simplicity.

    # Layer 2.
    h = jnp.dot(w2_ref[...], h.astype(jnp.bfloat16),
                preferred_element_type=jnp.float32) + b2_ref[...]
    h = jnp.maximum(h, LEAKY_SLOPE * h)                    # [H, TN]

    # Output layer (width 1): VPU multiply + sublane reduction, off the MXU.
    q = jnp.sum(h * w3_ref[...], axis=0, keepdims=True) + b3_ref[...]      # [1, TN]

    # tanh + lane-dense full-width store.
    o_ref[...] = jnp.tanh(q)[None].astype(o_ref.dtype)


@jax.jit
def mlp_network_forward(states, action_features, params):
    """states: [B, T, S] f32, action_features: [B, N, A] f32 -> Q values [B, N] f32."""
    B, _, state_dim = states.shape
    _, N, action_dim = action_features.shape
    D = state_dim + action_dim
    H = params["w1"].shape[0]

    if N == 0:  # empty action space (module returns zeros)
        return jnp.zeros((B, 0), jnp.float32)

    state = states[:, 0, :]                                # [B, S]

    # Fold the LayerNorm affine (gamma, beta) into layer 1 (exact, f32).
    w1p = params["w1"] * params["ln_gamma"][None, :]       # [H, D]
    b1p = params["b1"] + params["w1"] @ params["ln_beta"]  # [H]
    w1s = w1p[:, :state_dim]                               # [H, S]  (state columns)
    w1a = w1p[:, state_dim:]                               # [H, A]  (action columns)

    # Tiny per-batch precomputes (keep the state out of the per-row stream).
    v = state @ w1s.T                                      # [B, H]
    sstat = jnp.stack([jnp.sum(state, axis=1),
                       jnp.sum(state * state, axis=1)], axis=1)   # [B, 2]

    # Row tiling: actions go on the lane axis, TN multiple of 128.  Keep >= 2
    # parallel work units so both v7x TensorCores are busy.
    target = pl.cdiv(N, 2) if B == 1 else N
    TN = min(MAX_TN, _round_up(max(target, 1), 128))
    N_pad = _round_up(N, TN)
    num_tiles = N_pad // TN

    # Actions: bf16 (halves the dominant HBM read), features onto sublanes, pad rows.
    # TODO(synk): upstream producers could emit [B, A, N] bf16 directly and skip this transpose.
    a_t = jnp.swapaxes(action_features.astype(jnp.bfloat16), 1, 2)         # [B, A, N]
    if N_pad != N:
        a_t = jnp.pad(a_t, ((0, 0), (0, 0), (0, N_pad - N)))               # zero cols, sliced off

    kernel = functools.partial(_mlp_kernel, d_total=D)

    def resident(shape):
        # Constant block index => loaded once, stays VMEM-resident across the grid.
        return pl.BlockSpec(shape, lambda b, j: (0, 0))

    flops = int(2 * B * N_pad * (action_dim * H + H * H + H) + 12 * B * N_pad * H)
    cost = pl.CostEstimate(flops=flops, transcendentals=int(2 * B * N_pad),
                           bytes_accessed=int(a_t.size * 2 + B * N_pad * 4
                                              + 4 * (B * (H + 2) + H * (H + D + 5))))

    out = pl.pallas_call(
        kernel,
        out_shape=jax.ShapeDtypeStruct((B, 1, N_pad), jnp.float32),
        grid=(B, num_tiles),
        in_specs=[
            pl.BlockSpec(memory_space=pltpu.MemorySpace.SMEM),             # sstat [B,2]
            pl.BlockSpec((1, action_dim, TN), lambda b, j: (b, 0, j)),     # actions (pipelined)
            pl.BlockSpec((1, H, 1), lambda b, j: (b, 0, 0)),               # v_b
            resident((H, action_dim)),                                     # W1a' (bf16)
            resident((H, 1)),                                              # rowsum(W1s')
            resident((H, 1)),                                              # b1'
            resident((H, H)),                                              # W2 (bf16)
            resident((H, 1)),                                              # b2
            resident((H, 1)),                                              # W3 column
            resident((1, 1)),                                              # b3
        ],
        out_specs=pl.BlockSpec((1, 1, TN), lambda b, j: (b, 0, j)),
        compiler_params=pltpu.CompilerParams(
            dimension_semantics=("parallel", "parallel"),                  # megacore on v7x
            vmem_limit_bytes=32 * 1024 * 1024),
        cost_estimate=cost,
    )(
        sstat,
        a_t,
        v[:, :, None],
        w1a.astype(jnp.bfloat16),
        jnp.sum(w1s, axis=1)[:, None],
        b1p[:, None],
        params["w2"].astype(jnp.bfloat16),
        params["b2"][:, None],
        params["w3"][0][:, None],
        params["b3"][:, None],
    )
    # TODO(synk): sweep pipeline_mode=pl.Buffered(3) on the action BlockSpec if the
    # input DMA is still exposed after the larger tiles; keeping the default (2) here.

    # task_offset is zeros(1) -> adds nothing; drop row padding; squeeze(-1).
    return out[:, 0, :N]


def init_params(key, state_dim, action_dim, hidden_dim):
    """Deterministic synthetic parameters in natural PyTorch shapes."""
    D = state_dim + action_dim
    ks = jax.random.split(key, 7)
    scale = 0.1
    return {
        "ln_gamma": jnp.ones((D,), jnp.float32)
                    + 0.01 * jax.random.normal(ks[0], (D,), jnp.float32),
        "ln_beta": 0.01 * jax.random.normal(ks[1], (D,), jnp.float32),
        "w1": scale * jax.random.normal(ks[2], (hidden_dim, D), jnp.float32),
        "b1": scale * jax.random.normal(ks[3], (hidden_dim,), jnp.float32),
        "w2": scale * jax.random.normal(ks[4], (hidden_dim, hidden_dim), jnp.float32),
        "b2": scale * jax.random.normal(ks[5], (hidden_dim,), jnp.float32),
        "w3": scale * jax.random.normal(ks[6], (1, hidden_dim), jnp.float32),
        "b3": jnp.zeros((1,), jnp.float32),
    }


def reference_forward(states, action_features, params):
    """Pure-JAX f32 reference mirroring the PyTorch forward (eval mode)."""
    state = states[:, 0, :]
    B, S = state.shape
    N = action_features.shape[1]
    sa = jnp.concatenate(
        [jnp.broadcast_to(state[:, None, :], (B, N, S)), action_features], axis=2)
    mean = sa.mean(-1, keepdims=True)
    var = ((sa - mean) ** 2).mean(-1, keepdims=True)
    y = (sa - mean) / jnp.sqrt(var + LN_EPS) * params["ln_gamma"] + params["ln_beta"]
    h = y @ params["w1"].T + params["b1"]
    h = jnp.where(h > 0, h, LEAKY_SLOPE * h)
    h = h @ params["w2"].T + params["b2"]
    h = jnp.where(h > 0, h, LEAKY_SLOPE * h)
    q = jnp.tanh(h @ params["w3"].T + params["b3"])
    return q[..., 0]


if __name__ == "__main__":
    # Small shapes consistent with the module's forward:
    B, T, N = 2, 3, 8          # batch, seq len, num candidate actions
    state_dim, action_dim, hidden_dim = 12, 4, 32

    key = jax.random.PRNGKey(0)
    kp, ks, ka = jax.random.split(key, 3)

    params = init_params(kp, state_dim, action_dim, hidden_dim)
    states = jax.random.normal(ks, (B, T, state_dim), jnp.float32)
    action_features = jax.random.normal(ka, (B, N, action_dim), jnp.float32)

    q = mlp_network_forward(states, action_features, params)
    q = jax.block_until_ready(q)

    q_ref = reference_forward(states, action_features, params)
    assert q.shape == (B, N), q.shape
    # bf16 MXU operands => relaxed tolerance vs the f32 reference (tanh-bounded head).
    assert jnp.allclose(q, q_ref, atol=2e-2), (q, q_ref)

    # TODO(synk): dropout is identity in eval mode; training-mode stochastic dropout
    # (pltpu.prng_*) is not implemented.  The list-of-states / 2-D unbatched input
    # branches of the PyTorch forward are wrapper-level dispatch, not kernel work.
    print("KERNEL_OK")
</pallas_src>

<mosaic_0001>
module attributes {stable_mosaic.version = 11 : i64} {
  func.func @_mlp_kernel(%arg0: i32, %arg1: i32, %arg2: memref<2x2xf32, #tpu.memory_space<smem>>, %arg3: memref<1x4x128xbf16, #tpu.memory_space<vmem>>, %arg4: memref<1x32x1xf32, #tpu.memory_space<vmem>>, %arg5: memref<32x4xbf16, #tpu.memory_space<vmem>>, %arg6: memref<32x1xf32, #tpu.memory_space<vmem>>, %arg7: memref<32x1xf32, #tpu.memory_space<vmem>>, %arg8: memref<32x32xbf16, #tpu.memory_space<vmem>>, %arg9: memref<32x1xf32, #tpu.memory_space<vmem>>, %arg10: memref<32x1xf32, #tpu.memory_space<vmem>>, %arg11: memref<1x1xf32, #tpu.memory_space<vmem>>, %arg12: memref<1x1x128xf32, #tpu.memory_space<vmem>>) attributes {dimension_semantics = [#tpu.dimension_semantics<parallel>, #tpu.dimension_semantics<parallel>], iteration_bounds = array<i64: 2, 1>, scalar_prefetch = 0 : i64, scratch_operands = 0 : i64, tpu.core_type = #tpu.core_type<tc>, window_params = [{transform_indices = @transform_0, window_bounds = array<i64: 2, 2>}, {transform_indices = @transform_1, window_bounds = array<i64: 1, 4, 128>}, {transform_indices = @transform_2, window_bounds = array<i64: 1, 32, 1>}, {pipeline_mode = #tpu.pipeline_mode<synchronous>, transform_indices = @transform_3, window_bounds = array<i64: 32, 4>}, {pipeline_mode = #tpu.pipeline_mode<synchronous>, transform_indices = @transform_4, window_bounds = array<i64: 32, 1>}, {pipeline_mode = #tpu.pipeline_mode<synchronous>, transform_indices = @transform_5, window_bounds = array<i64: 32, 1>}, {pipeline_mode = #tpu.pipeline_mode<synchronous>, transform_indices = @transform_6, window_bounds = array<i64: 32, 32>}, {pipeline_mode = #tpu.pipeline_mode<synchronous>, transform_indices = @transform_7, window_bounds = array<i64: 32, 1>}, {pipeline_mode = #tpu.pipeline_mode<synchronous>, transform_indices = @transform_8, window_bounds = array<i64: 32, 1>}, {pipeline_mode = #tpu.pipeline_mode<synchronous>, transform_indices = @transform_9, window_bounds = array<i64: 1, 1>}, {transform_indices = @transform_10, window_bounds = array<i64: 1, 1, 128>}]} {
    %c0 = arith.constant 0 : index
    %c0_0 = arith.constant 0 : index
    %c0_1 = arith.constant 0 : index
    %0 = vector.load %arg3[%c0, %c0_0, %c0_1] : memref<1x4x128xbf16, #tpu.memory_space<vmem>>, vector<1x4x128xbf16>
    %1 = vector.shape_cast %0 : vector<1x4x128xbf16> to vector<4x128xbf16>
    %2 = arith.extf %1 : vector<4x128xbf16> to vector<4x128xf32>
    %3 = arith.index_cast %arg0 : i32 to index
    %c0_2 = arith.constant 0 : index
    %4 = memref.load %arg2[%3, %c0_2] : memref<2x2xf32, #tpu.memory_space<smem>>
    %5 = arith.index_cast %arg0 : i32 to index
    %c1 = arith.constant 1 : index
    %6 = memref.load %arg2[%5, %c1] : memref<2x2xf32, #tpu.memory_space<smem>>
    %cst = arith.constant dense<0.000000e+00> : vector<128xf32>
    %7 = vector.multi_reduction <add>, %2, %cst [0] : vector<4x128xf32> to vector<128xf32>
    %8 = vector.shape_cast %7 : vector<128xf32> to vector<1x128xf32>
    %9 = arith.mulf %2, %2 : vector<4x128xf32>
    %cst_3 = arith.constant dense<0.000000e+00> : vector<128xf32>
    %10 = vector.multi_reduction <add>, %9, %cst_3 [0] : vector<4x128xf32> to vector<128xf32>
    %11 = vector.shape_cast %10 : vector<128xf32> to vector<1x128xf32>
    %12 = vector.broadcast %4 : f32 to vector<1x128xf32>
    %13 = arith.addf %8, %12 : vector<1x128xf32>
    %cst_4 = arith.constant 6.250000e-02 : f32
    %14 = vector.broadcast %cst_4 : f32 to vector<1x128xf32>
    %15 = arith.mulf %13, %14 : vector<1x128xf32>
    %16 = vector.broadcast %6 : f32 to vector<1x128xf32>
    %17 = arith.addf %11, %16 : vector<1x128xf32>
    %cst_5 = arith.constant 6.250000e-02 : f32
    %18 = vector.broadcast %cst_5 : f32 to vector<1x128xf32>
    %19 = arith.mulf %17, %18 : vector<1x128xf32>
    %20 = arith.mulf %15, %15 : vector<1x128xf32>
    %21 = arith.subf %19, %20 : vector<1x128xf32>
    %cst_6 = arith.constant 9.99999974E-6 : f32
    %22 = vector.broadcast %cst_6 : f32 to vector<1x128xf32>
    %23 = arith.addf %21, %22 : vector<1x128xf32>
    %24 = math.rsqrt %23 : vector<1x128xf32>
    %25 = arith.mulf %15, %24 : vector<1x128xf32>
    %26 = vector.broadcast %15 : vector<1x128xf32> to vector<4x128xf32>
    %27 = arith.subf %2, %26 : vector<4x128xf32>
    %28 = vector.broadcast %24 : vector<1x128xf32> to vector<4x128xf32>
    %29 = arith.mulf %27, %28 : vector<4x128xf32>
    %30 = arith.truncf %29 : vector<4x128xf32> to vector<4x128xbf16>
    %c0_7 = arith.constant 0 : index
    %c0_8 = arith.constant 0 : index
    %31 = vector.load %arg5[%c0_7, %c0_8] : memref<32x4xbf16, #tpu.memory_space<vmem>>, vector<32x4xbf16>
    %cst_9 = arith.constant dense<0.000000e+00> : vector<32x128xf32>
    %32 = tpu.matmul %31, %30, %cst_9 {dimension_numbers = #tpu.dot_dimension_numbers<[1], [0], [0], [1], [0, 0, 1, 1], [], []>} : vector<32x4xbf16>, vector<4x128xbf16>, vector<32x128xf32> -> vector<32x128xf32>
    %c0_10 = arith.constant 0 : index
    %c0_11 = arith.constant 0 : index
    %c0_12 = arith.constant 0 : index
    %33 = vector.load %arg4[%c0_10, %c0_11, %c0_12] : memref<1x32x1xf32, #tpu.memory_space<vmem>>, vector<1x32x1xf32>
    %34 = vector.shape_cast %33 : vector<1x32x1xf32> to vector<32x1xf32>
    %35 = vector.broadcast %34 : vector<32x1xf32> to vector<32x128xf32>
    %36 = vector.broadcast %24 : vector<1x128xf32> to vector<32x128xf32>
    %37 = arith.mulf %35, %36 : vector<32x128xf32>
    %38 = arith.addf %32, %37 : vector<32x128xf32>
    %c0_13 = arith.constant 0 : index
    %c0_14 = arith.constant 0 : index
    %39 = vector.load %arg6[%c0_13, %c0_14] : memref<32x1xf32, #tpu.memory_space<vmem>>, vector<32x1xf32>
    %40 = vector.broadcast %39 : vector<32x1xf32> to vector<32x128xf32>
    %41 = vector.broadcast %25 : vector<1x128xf32> to vector<32x128xf32>
    %42 = arith.mulf %40, %41 : vector<32x128xf32>
    %43 = arith.subf %38, %42 : vector<32x128xf32>
    %c0_15 = arith.constant 0 : index
    %c0_16 = arith.constant 0 : index
    %44 = vector.load %arg7[%c0_15, %c0_16] : memref<32x1xf32, #tpu.memory_space<vmem>>, vector<32x1xf32>
    %45 = vector.broadcast %44 : vector<32x1xf32> to vector<32x128xf32>
    %46 = arith.addf %43, %45 : vector<32x128xf32>
    %cst_17 = arith.constant 0.00999999977 : f32
    %47 = vector.broadcast %cst_17 : f32 to vector<32x128xf32>
    %48 = arith.mulf %47, %46 : vector<32x128xf32>
    %49 = arith.maximumf %46, %48 : vector<32x128xf32>
    %c0_18 = arith.constant 0 : index
    %c0_19 = arith.constant 0 : index
    %50 = vector.load %arg8[%c0_18, %c0_19] : memref<32x32xbf16, #tpu.memory_space<vmem>>, vector<32x32xbf16>
    %51 = arith.truncf %49 : vector<32x128xf32> to vector<32x128xbf16>
    %cst_20 = arith.constant dense<0.000000e+00> : vector<32x128xf32>
    %52 = tpu.matmul %50, %51, %cst_20 {dimension_numbers = #tpu.dot_dimension_numbers<[1], [0], [0], [1], [0, 0, 1, 1], [], []>} : vector<32x32xbf16>, vector<32x128xbf16>, vector<32x128xf32> -> vector<32x128xf32>
    %c0_21 = arith.constant 0 : index
    %c0_22 = arith.constant 0 : index
    %53 = vector.load %arg9[%c0_21, %c0_22] : memref<32x1xf32, #tpu.memory_space<vmem>>, vector<32x1xf32>
    %54 = vector.broadcast %53 : vector<32x1xf32> to vector<32x128xf32>
    %55 = arith.addf %52, %54 : vector<32x128xf32>
    %cst_23 = arith.constant 0.00999999977 : f32
    %56 = vector.broadcast %cst_23 : f32 to vector<32x128xf32>
    %57 = arith.mulf %56, %55 : vector<32x128xf32>
    %58 = arith.maximumf %55, %57 : vector<32x128xf32>
    %c0_24 = arith.constant 0 : index
    %c0_25 = arith.constant 0 : index
    %59 = vector.load %arg10[%c0_24, %c0_25] : memref<32x1xf32, #tpu.memory_space<vmem>>, vector<32x1xf32>
    %60 = vector.broadcast %59 : vector<32x1xf32> to vector<32x128xf32>
    %61 = arith.mulf %58, %60 : vector<32x128xf32>
    %cst_26 = arith.constant dense<0.000000e+00> : vector<128xf32>
    %62 = vector.multi_reduction <add>, %61, %cst_26 [0] : vector<32x128xf32> to vector<128xf32>
    %63 = vector.shape_cast %62 : vector<128xf32> to vector<1x128xf32>
    %c0_27 = arith.constant 0 : index
    %c0_28 = arith.constant 0 : index
    %64 = vector.load %arg11[%c0_27, %c0_28] : memref<1x1xf32, #tpu.memory_space<vmem>>, vector<1x1xf32>
    %65 = vector.broadcast %64 : vector<1x1xf32> to vector<1x128xf32>
    %66 = arith.addf %63, %65 : vector<1x128xf32>
    %67 = math.tanh %66 : vector<1x128xf32>
    %68 = vector.shape_cast %67 : vector<1x128xf32> to vector<1x1x128xf32>
    %c0_29 = arith.constant 0 : index
    %c0_30 = arith.constant 0 : index
    %c0_31 = arith.constant 0 : index
    %69 = vector.load %arg12[%c0_29, %c0_30, %c0_31] : memref<1x1x128xf32, #tpu.memory_space<vmem>>, vector<1x1x128xf32>
    tpu.vector_store %arg12[%c0_29, %c0_30, %c0_31], %68 {strides = array<i32>} : memref<1x1x128xf32, #tpu.memory_space<vmem>>, vector<1x1x128xf32>,
    return
  }
  func.func @transform_0(%arg0: i32, %arg1: i32) -> (i32, i32) {
    %c0_i32 = arith.constant 0 : i32
    %c0_i32_0 = arith.constant 0 : i32
    %c0_i32_1 = arith.constant 0 : i32
    return %c0_i32, %c0_i32_0 : i32, i32
  }
  func.func @transform_1(%arg0: i32, %arg1: i32) -> (i32, i32, i32) {
    %c0_i32 = arith.constant 0 : i32
    %c0_i32_0 = arith.constant 0 : i32
    return %arg0, %c0_i32, %arg1 : i32, i32, i32
  }
  func.func @transform_2(%arg0: i32, %arg1: i32) -> (i32, i32, i32) {
    %c0_i32 = arith.constant 0 : i32
    %c0_i32_0 = arith.constant 0 : i32
    %c0_i32_1 = arith.constant 0 : i32
    return %arg0, %c0_i32, %c0_i32_0 : i32, i32, i32
  }
  func.func @transform_3(%arg0: i32, %arg1: i32) -> (i32, i32) {
    %c0_i32 = arith.constant 0 : i32
    %c0_i32_0 = arith.constant 0 : i32
    %c0_i32_1 = arith.constant 0 : i32
    return %c0_i32, %c0_i32_0 : i32, i32
  }
  func.func @transform_4(%arg0: i32, %arg1: i32) -> (i32, i32) {
    %c0_i32 = arith.constant 0 : i32
    %c0_i32_0 = arith.constant 0 : i32
    %c0_i32_1 = arith.constant 0 : i32
    return %c0_i32, %c0_i32_0 : i32, i32
  }
  func.func @transform_5(%arg0: i32, %arg1: i32) -> (i32, i32) {
    %c0_i32 = arith.constant 0 : i32
    %c0_i32_0 = arith.constant 0 : i32
    %c0_i32_1 = arith.constant 0 : i32
    return %c0_i32, %c0_i32_0 : i32, i32
  }
  func.func @transform_6(%arg0: i32, %arg1: i32) -> (i32, i32) {
    %c0_i32 = arith.constant 0 : i32
    %c0_i32_0 = arith.constant 0 : i32
    %c0_i32_1 = arith.constant 0 : i32
    return %c0_i32, %c0_i32_0 : i32, i32
  }
  func.func @transform_7(%arg0: i32, %arg1: i32) -> (i32, i32) {
    %c0_i32 = arith.constant 0 : i32
    %c0_i32_0 = arith.constant 0 : i32
    %c0_i32_1 = arith.constant 0 : i32
    return %c0_i32, %c0_i32_0 : i32, i32
  }
  func.func @transform_8(%arg0: i32, %arg1: i32) -> (i32, i32) {
    %c0_i32 = arith.constant 0 : i32
    %c0_i32_0 = arith.constant 0 : i32
    %c0_i32_1 = arith.constant 0 : i32
    return %c0_i32, %c0_i32_0 : i32, i32
  }
  func.func @transform_9(%arg0: i32, %arg1: i32) -> (i32, i32) {
    %c0_i32 = arith.constant 0 : i32
    %c0_i32_0 = arith.constant 0 : i32
    %c0_i32_1 = arith.constant 0 : i32
    return %c0_i32, %c0_i32_0 : i32, i32
  }
  func.func @transform_10(%arg0: i32, %arg1: i32) -> (i32, i32, i32) {
    %c0_i32 = arith.constant 0 : i32
    %c0_i32_0 = arith.constant 0 : i32
    return %arg0, %c0_i32, %arg1 : i32, i32, i32
  }
}

</mosaic_0001>

<llo_original>
// kernel: mlp_network_forward.1
$region0: #{mlp_network_forward.1}
  #allocation0 [shape = 'u32[]', space=smem, size = 0x4, offset = 0x4, fixed_abs, tag = 'smem constant byte address 0x4 - core index']
  #allocation1 [shape = 'u32[144,128]{1,0:T(1,128)}', space=vmem, size = 0x12000, scoped, tag = 'internal scratch']
  #allocation2 [shape = 'f32[1,1]{1,0:T(1,128)S(1)}', space=vmem, size = 0x200, scoped, tag = 'scoped memory for mlp_network_forward.1']
  %s0 = inlined_call_operand.vmem [shape: f32[2,2], index: 0, kind: input, shape index: {}]
  %s1 = inlined_call_operand.vmem [shape: bf16[2,4,128], index: 1, kind: input, shape index: {}]
  %s2 = inlined_call_operand.vmem [shape: f32[2,32,1], index: 2, kind: input, shape index: {}]
  %s3 = inlined_call_operand.vmem [shape: bf16[32,4], index: 3, kind: input, shape index: {}]
  %s4 = inlined_call_operand.vmem [shape: f32[32,1], index: 4, kind: input, shape index: {}]
  %s5 = inlined_call_operand.vmem [shape: f32[32,1], index: 5, kind: input, shape index: {}]
  %s6 = inlined_call_operand.vmem [shape: bf16[32,32], index: 6, kind: input, shape index: {}]
  %s7 = inlined_call_operand.vmem [shape: f32[32,1], index: 7, kind: input, shape index: {}]
  %s8 = inlined_call_operand.vmem [shape: f32[32,1], index: 8, kind: input, shape index: {}]
  %s9 = inlined_call_operand.<no memory space> [shape: f32[1,1], index: 9, kind: input, shape index: {}]
  %s10 = inlined_call_operand.hbm [shape: f32[2,1,128], index: 10, kind: output, shape index: {}]
  %s11 = sld [smem:[#allocation0]]
  $region77: #{mlp_network_forward.1} parent=0
    _
  %s13 = ssub.s32 1, %s11
  %s14 = scalar_select 0, %s13, %s11
  %v15 = vstv %s9
  %16 = vst [vmem:[#allocation2] sm:$0x1] %v15
  $region1: #{mlp_network_forward.1} parent=0
    #allocation3 [shape = 'u8[1024]{0}', space=smem, size = 0x400, scoped, tag = 'input window, operand 0, single buffered']
    #allocation4 [shape = 's32[2]{0}', space=sflag, size = 0x8, scoped, tag = 'scoped memory for mlp_network_forward.1']
    #allocation5 [shape = 's32[2]{0}', space=sflag, size = 0x8, scoped, tag = 'scoped memory for mlp_network_forward.1']
    #allocation6 [shape = 'u8[1024]{0}', space=vmem, size = 0x400, scoped, tag = 'output window, operand 0']
    %17 = vsyncpa [#allocation5], 0
    %18 = vsyncpa [#allocation4], 0
    %s19 = scalar_lea.sflag [#allocation4], 1
    %20 = vsyncpa %s19, 0
    loop: start=0, step=1, limit=4
    $region2: #{mlp_network_forward.1} parent=1 // loop_pre_header
      _
    $region3: #{mlp_network_forward.1} parent=1 // loop_header
      %s22 = sphi 0, %s26
      %p23 = scmp.ge.s32.totalorder %s22, 4
      %s29 = sphi 0, %s41
      %s30 = sphi 0, %s37
      %s31 = sphi 0, %s29
      %s32 = sphi 0, %s30
      %s33 = sphi 0, %s31
      %s34 = sphi 0, %s32
      %s42 = sphi 0, %s42
      %s44 = sphi 0, %s42
      %s45 = sphi 0, %s44
      %s59 = sphi 0, %s45
      %s67 = sphi 0, %s69
      %s70 = sphi 0, %s67
      %s71 = sphi 0, %s70
      %s87 = sphi 0, %s71
      %s93 = sphi 0, %s95
      %s96 = sphi 0, %s93
      %s97 = sphi 0, %s96
      %s113 = sphi 0, %s97
      %s117 = sphi 0, %s117
      %s119 = sphi 0, %s117
      %s120 = sphi 0, %s119
      %s134 = sphi 0, %s120
      %s138 = sphi 0, %s138
      %s140 = sphi 0, %s138
      %s141 = sphi 0, %s140
      %s155 = sphi 0, %s141
      %s159 = sphi 0, %s159
      %s161 = sphi 0, %s159
      %s162 = sphi 0, %s161
      %s176 = sphi 0, %s162
      %s180 = sphi 0, %s180
      %s182 = sphi 0, %s180
      %s183 = sphi 0, %s182
      %s197 = sphi 0, %s183
      %s201 = sphi 0, %s201
      %s203 = sphi 0, %s201
      %s204 = sphi 0, %s203
      %s218 = sphi 0, %s204
      %s222 = sphi 0, %s222
      %s224 = sphi 0, %s222
      %s225 = sphi 0, %s224
      %s239 = sphi 0, %s225
      %s243 = sphi 0, %s243
      %s245 = sphi 0, %s243
      %s246 = sphi 0, %s245
      %s260 = sphi 0, %s246
      %s268 = sphi 0, %s270
      %s271 = sphi 0, %s268
      %s272 = sphi 0, %s271
      %s288 = sphi 0, %s272
    $region4: #{mlp_network_forward.1} parent=1 // loop_header_branch
      %25 = sbr.rel (%p23) target = $region8
    $region5: #{mlp_network_forward.1} parent=1 // loop_body
      %s27 = ssub.s32 %s22, 1
      %s28 = ssub.s32 %s22, 2
      %s35 = sadd.s32 1, %s30
      %p36 = scmp.ge.s32.totalorder %s35, 1
      %s37 = scalar_select %p36, 0, %s35
      %s38 = sadd.s32 1, %s29
      %s39 = scalar_select %p36, %s38, %s29
      %p40 = scmp.ge.s32.totalorder %s39, 2
      %s41 = scalar_select %p40, 0, %s39
      %s43 = sadd.s32 %s42, 1
      %p46 = scmp.eq.s32.totalorder %s22, 1
      %p47 = scmp.ne.s32.totalorder %s42, %s44
      %p48 = scmp.eq.s32.totalorder %s22, 0
      %p49 = por %p47, %p48
      %p50 = scmp.ne.s32.totalorder %s42, %s44
      %p51 = scmp.eq.s32.totalorder %s27, 1
      %p52 = por %p50, %p51
      %p53 = scmp.ne.s32.totalorder %s44, %s45
      %p54 = scmp.eq.s32.totalorder %s27, 0
      %p55 = por %p53, %p54
      %p56 = scmp.ne.s32.totalorder %s44, %s45
      %p57 = scmp.eq.s32.totalorder %s28, 1
      %p58 = por %p56, %p57
      %p60 = scmp.ne.s32.totalorder %s45, %s59
      %p61 = scmp.eq.s32.totalorder %s28, 0
      %p62 = por %p60, %p61
      %s63 = ssub.s32 %s29, %s41
      %s64 = ssub.s32 %s30, %s37
      %s65 = sor.u32 %s63, %s64
      %p66 = scmp.eq.s32.totalorder %s65, 0
      %s68 = sadd.s32 %s67, 1
      %s69 = scalar_select %p66, %s67, %s68
      %p72 = pneg %p66
      %p73 = scmp.eq.s32.totalorder %s22, 1
      %p74 = por %p72, %p73
      %p75 = scmp.ne.s32.totalorder %s67, %s70
      %p76 = scmp.eq.s32.totalorder %s22, 0
      %p77 = por %p75, %p76
      %p78 = scmp.ne.s32.totalorder %s67, %s70
      %p79 = scmp.eq.s32.totalorder %s27, 1
      %p80 = por %p78, %p79
      %p81 = scmp.ne.s32.totalorder %s70, %s71
      %p82 = scmp.eq.s32.totalorder %s27, 0
      %p83 = por %p81, %p82
      %p84 = scmp.ne.s32.totalorder %s70, %s71
      %p85 = scmp.eq.s32.totalorder %s28, 1
      %p86 = por %p84, %p85
      %p88 = scmp.ne.s32.totalorder %s71, %s87
      %p89 = scmp.eq.s32.totalorder %s28, 0
      %p90 = por %p88, %p89
      %s91 = ssub.s32 %s29, %s41
      %p92 = scmp.eq.s32.totalorder %s91, 0
      %s94 = sadd.s32 %s93, 1
      %s95 = scalar_select %p92, %s93, %s94
      %p98 = pneg %p92
      %p99 = scmp.eq.s32.totalorder %s22, 1
      %p100 = por %p98, %p99
      %p101 = scmp.ne.s32.totalorder %s93, %s96
      %p102 = scmp.eq.s32.totalorder %s22, 0
      %p103 = por %p101, %p102
      %p104 = scmp.ne.s32.totalorder %s93, %s96
      %p105 = scmp.eq.s32.totalorder %s27, 1
      %p106 = por %p104, %p105
      %p107 = scmp.ne.s32.totalorder %s96, %s97
      %p108 = scmp.eq.s32.totalorder %s27, 0
      %p109 = por %p107, %p108
      %p110 = scmp.ne.s32.totalorder %s96, %s97
      %p111 = scmp.eq.s32.totalorder %s28, 1
      %p112 = por %p110, %p111
      %p114 = scmp.ne.s32.totalorder %s97, %s113
      %p115 = scmp.eq.s32.totalorder %s28, 0
      %p116 = por %p114, %p115
      %s118 = sadd.s32 %s117, 1
      %p121 = scmp.eq.s32.totalorder %s22, 1
      %p122 = scmp.ne.s32.totalorder %s117, %s119
      %p123 = scmp.eq.s32.totalorder %s22, 0
      %p124 = por %p122, %p123
      %p125 = scmp.ne.s32.totalorder %s117, %s119
      %p126 = scmp.eq.s32.totalorder %s27, 1
      %p127 = por %p125, %p126
      %p128 = scmp.ne.s32.totalorder %s119, %s120
      %p129 = scmp.eq.s32.totalorder %s27, 0
      %p130 = por %p128, %p129
      %p131 = scmp.ne.s32.totalorder %s119, %s120
      %p132 = scmp.eq.s32.totalorder %s28, 1
      %p133 = por %p131, %p132
      %p135 = scmp.ne.s32.totalorder %s120, %s134
      %p136 = scmp.eq.s32.totalorder %s28, 0
      %p137 = por %p135, %p136
      %s139 = sadd.s32 %s138, 1
      %p142 = scmp.eq.s32.totalorder %s22, 1
      %p143 = scmp.ne.s32.totalorder %s138, %s140
      %p144 = scmp.eq.s32.totalorder %s22, 0
      %p145 = por %p143, %p144
      %p146 = scmp.ne.s32.totalorder %s138, %s140
      %p147 = scmp.eq.s32.totalorder %s27, 1
      %p148 = por %p146, %p147
      %p149 = scmp.ne.s32.totalorder %s140, %s141
      %p150 = scmp.eq.s32.totalorder %s27, 0
      %p151 = por %p149, %p150
      %p152 = scmp.ne.s32.totalorder %s140, %s141
      %p153 = scmp.eq.s32.totalorder %s28, 1
      %p154 = por %p152, %p153
      %p156 = scmp.ne.s32.totalorder %s141, %s155
      %p157 = scmp.eq.s32.totalorder %s28, 0
      %p158 = por %p156, %p157
      %s160 = sadd.s32 %s159, 1
      %p163 = scmp.eq.s32.totalorder %s22, 1
      %p164 = scmp.ne.s32.totalorder %s159, %s161
      %p165 = scmp.eq.s32.totalorder %s22, 0
      %p166 = por %p164, %p165
      %p167 = scmp.ne.s32.totalorder %s159, %s161
      %p168 = scmp.eq.s32.totalorder %s27, 1
      %p169 = por %p167, %p168
      %p170 = scmp.ne.s32.totalorder %s161, %s162
      %p171 = scmp.eq.s32.totalorder %s27, 0
      %p172 = por %p170, %p171
      %p173 = scmp.ne.s32.totalorder %s161, %s162
      %p174 = scmp.eq.s32.totalorder %s28, 1
      %p175 = por %p173, %p174
      %p177 = scmp.ne.s32.totalorder %s162, %s176
      %p178 = scmp.eq.s32.totalorder %s28, 0
      %p179 = por %p177, %p178
      %s181 = sadd.s32 %s180, 1
      %p184 = scmp.eq.s32.totalorder %s22, 1
      %p185 = scmp.ne.s32.totalorder %s180, %s182
      %p186 = scmp.eq.s32.totalorder %s22, 0
      %p187 = por %p185, %p186
      %p188 = scmp.ne.s32.totalorder %s180, %s182
      %p189 = scmp.eq.s32.totalorder %s27, 1
      %p190 = por %p188, %p189
      %p191 = scmp.ne.s32.totalorder %s182, %s183
      %p192 = scmp.eq.s32.totalorder %s27, 0
      %p193 = por %p191, %p192
      %p194 = scmp.ne.s32.totalorder %s182, %s183
      %p195 = scmp.eq.s32.totalorder %s28, 1
      %p196 = por %p194, %p195
      %p198 = scmp.ne.s32.totalorder %s183, %s197
      %p199 = scmp.eq.s32.totalorder %s28, 0
      %p200 = por %p198, %p199
      %s202 = sadd.s32 %s201, 1
      %p205 = scmp.eq.s32.totalorder %s22, 1
      %p206 = scmp.ne.s32.totalorder %s201, %s203
      %p207 = scmp.eq.s32.totalorder %s22, 0
      %p208 = por %p206, %p207
      %p209 = scmp.ne.s32.totalorder %s201, %s203
      %p210 = scmp.eq.s32.totalorder %s27, 1
      %p211 = por %p209, %p210
      %p212 = scmp.ne.s32.totalorder %s203, %s204
      %p213 = scmp.eq.s32.totalorder %s27, 0
      %p214 = por %p212, %p213
      %p215 = scmp.ne.s32.totalorder %s203, %s204
      %p216 = scmp.eq.s32.totalorder %s28, 1
      %p217 = por %p215, %p216
      %p219 = scmp.ne.s32.totalorder %s204, %s218
      %p220 = scmp.eq.s32.totalorder %s28, 0
      %p221 = por %p219, %p220
      %s223 = sadd.s32 %s222, 1
      %p226 = scmp.eq.s32.totalorder %s22, 1
      %p227 = scmp.ne.s32.totalorder %s222, %s224
      %p228 = scmp.eq.s32.totalorder %s22, 0
      %p229 = por %p227, %p228
      %p230 = scmp.ne.s32.totalorder %s222, %s224
      %p231 = scmp.eq.s32.totalorder %s27, 1
      %p232 = por %p230, %p231
      %p233 = scmp.ne.s32.totalorder %s224, %s225
      %p234 = scmp.eq.s32.totalorder %s27, 0
      %p235 = por %p233, %p234
      %p236 = scmp.ne.s32.totalorder %s224, %s225
      %p237 = scmp.eq.s32.totalorder %s28, 1
      %p238 = por %p236, %p237
      %p240 = scmp.ne.s32.totalorder %s225, %s239
      %p241 = scmp.eq.s32.totalorder %s28, 0
      %p242 = por %p240, %p241
      %s244 = sadd.s32 %s243, 1
      %p247 = scmp.eq.s32.totalorder %s22, 1
      %p248 = scmp.ne.s32.totalorder %s243, %s245
      %p249 = scmp.eq.s32.totalorder %s22, 0
      %p250 = por %p248, %p249
      %p251 = scmp.ne.s32.totalorder %s243, %s245
      %p252 = scmp.eq.s32.totalorder %s27, 1
      %p253 = por %p251, %p252
      %p254 = scmp.ne.s32.totalorder %s245, %s246
      %p255 = scmp.eq.s32.totalorder %s27, 0
      %p256 = por %p254, %p255
      %p257 = scmp.ne.s32.totalorder %s245, %s246
      %p258 = scmp.eq.s32.totalorder %s28, 1
      %p259 = por %p257, %p258
      %p261 = scmp.ne.s32.totalorder %s246, %s260
      %p262 = scmp.eq.s32.totalorder %s28, 0
      %p263 = por %p261, %p262
      %s264 = ssub.s32 %s29, %s41
      %s265 = ssub.s32 %s30, %s37
      %s266 = sor.u32 %s264, %s265
      %p267 = scmp.eq.s32.totalorder %s266, 0
      %s269 = sadd.s32 %s268, 1
      %s270 = scalar_select %p267, %s268, %s269
      %p273 = pneg %p267
      %p274 = scmp.eq.s32.totalorder %s22, 1
      %p275 = por %p273, %p274
      %p276 = scmp.ne.s32.totalorder %s268, %s271
      %p277 = scmp.eq.s32.totalorder %s22, 0
      %p278 = por %p276, %p277
      %p279 = scmp.ne.s32.totalorder %s268, %s271
      %p280 = scmp.eq.s32.totalorder %s27, 1
      %p281 = por %p279, %p280
      %p282 = scmp.ne.s32.totalorder %s271, %s272
      %p283 = scmp.eq.s32.totalorder %s27, 0
      %p284 = por %p282, %p283
      %p285 = scmp.ne.s32.totalorder %s271, %s272
      %p286 = scmp.eq.s32.totalorder %s28, 1
      %p287 = por %p285, %p286
      %p289 = scmp.ne.s32.totalorder %s272, %s288
      %p290 = scmp.eq.s32.totalorder %s28, 0
      %p291 = por %p289, %p290
      %p292 = scmp.le.s32.totalorder 1, %s22
      %p293 = scmp.lt.s32.totalorder %s22, 3
      %p294 = pnand %p292, %p293
      %p295 = pneg %p294
      // Predicated region
      $region9: #{mlp_network_forward.1} parent=5 // pred_check
        _
      $region10: #{mlp_network_forward.1} parent=5 // pred_check_branch
        %297 = sbr.rel (%p294) target = $region12
      $region11: #{mlp_network_forward.1} parent=5 // pred_region
        %s298 = ssub.s32 %s22, 1
        // Predicated region
        $region13: #{mlp_network_forward.1} parent=11 // pred_check
          %p299 = pneg %p55
        $region14: #{mlp_network_forward.1} parent=11 // pred_check_branch
          %301 = sbr.rel (%p299) target = $region16
        $region15: #{mlp_network_forward.1} parent=11 // pred_region
          %s303 = ssub.s32 32, 32
          %304 = vsyncadd [#allocation5], %s303
          %s306 = sshll.u32 %s0, 4
          %s307 = int_to_ptr.vmem [resolvable:$true] %s306
          %309 = dma.vmem_to_smem %s307, 32, [#allocation3], [#allocation5]
        $region16: #{mlp_network_forward.1} parent=11 // pred_fallthru
          _
        // Predicated region
        $region17: #{mlp_network_forward.1} parent=11 // pred_check
          %p310 = pneg %p130
        $region18: #{mlp_network_forward.1} parent=11 // pred_check_branch
          %312 = sbr.rel (%p310) target = $region20
        $region19: #{mlp_network_forward.1} parent=11 // pred_region
          _
        $region20: #{mlp_network_forward.1} parent=11 // pred_fallthru
          _
        // Predicated region
        $region21: #{mlp_network_forward.1} parent=11 // pred_check
          %p313 = pneg %p151
        $region22: #{mlp_network_forward.1} parent=11 // pred_check_branch
          %315 = sbr.rel (%p313) target = $region24
        $region23: #{mlp_network_forward.1} parent=11 // pred_region
          _
        $region24: #{mlp_network_forward.1} parent=11 // pred_fallthru
          _
        // Predicated region
        $region25: #{mlp_network_forward.1} parent=11 // pred_check
          %p316 = pneg %p172
        $region26: #{mlp_network_forward.1} parent=11 // pred_check_branch
          %318 = sbr.rel (%p316) target = $region28
        $region27: #{mlp_network_forward.1} parent=11 // pred_region
          _
        $region28: #{mlp_network_forward.1} parent=11 // pred_fallthru
          _
        // Predicated region
        $region29: #{mlp_network_forward.1} parent=11 // pred_check
          %p319 = pneg %p193
        $region30: #{mlp_network_forward.1} parent=11 // pred_check_branch
          %321 = sbr.rel (%p319) target = $region32
        $region31: #{mlp_network_forward.1} parent=11 // pred_region
          _
        $region32: #{mlp_network_forward.1} parent=11 // pred_fallthru
          _
        // Predicated region
        $region33: #{mlp_network_forward.1} parent=11 // pred_check
          %p322 = pneg %p214
        $region34: #{mlp_network_forward.1} parent=11 // pred_check_branch
          %324 = sbr.rel (%p322) target = $region36
        $region35: #{mlp_network_forward.1} parent=11 // pred_region
          _
        $region36: #{mlp_network_forward.1} parent=11 // pred_fallthru
          _
        // Predicated region
        $region37: #{mlp_network_forward.1} parent=11 // pred_check
          %p325 = pneg %p235
        $region38: #{mlp_network_forward.1} parent=11 // pred_check_branch
          %327 = sbr.rel (%p325) target = $region40
        $region39: #{mlp_network_forward.1} parent=11 // pred_region
          _
        $region40: #{mlp_network_forward.1} parent=11 // pred_fallthru
          _
        // Predicated region
        $region41: #{mlp_network_forward.1} parent=11 // pred_check
          %p328 = pneg %p256
        $region42: #{mlp_network_forward.1} parent=11 // pred_check_branch
          %330 = sbr.rel (%p328) target = $region44
        $region43: #{mlp_network_forward.1} parent=11 // pred_region
          _
        $region44: #{mlp_network_forward.1} parent=11 // pred_fallthru
          _
      $region12: #{mlp_network_forward.1} parent=5 // pred_fallthru
        _
      %p331 = scmp.lt.s32.totalorder %s22, 2
      // Predicated region
      $region45: #{mlp_network_forward.1} parent=5 // pred_check
        %p332 = pneg %p331
      $region46: #{mlp_network_forward.1} parent=5 // pred_check_branch
        %334 = sbr.rel (%p332) target = $region48
      $region47: #{mlp_network_forward.1} parent=5 // pred_region
        // Predicated region
        $region49: #{mlp_network_forward.1} parent=47 // pred_check
          %p335 = pneg %p77
        $region50: #{mlp_network_forward.1} parent=47 // pred_check_branch
          %337 = sbr.rel (%p335) target = $region52
        $region51: #{mlp_network_forward.1} parent=47 // pred_region
          %p338 = scmp.lt.s32.totalorder %s29, 1
          %s339 = scalar_select %p338, %s29, 1
          %p340 = scmp.lt.s32.totalorder %s30, 0
          %s341 = scalar_select %p340, %s30, 0
          %s342 = sadd.s32 %s341, %s339
          %s343 = smul.addr %s342, 2
          %s344 = scalar_lea.vmem %s1, %s343
        $region52: #{mlp_network_forward.1} parent=47 // pred_fallthru
          _
        // Predicated region
        $region53: #{mlp_network_forward.1} parent=47 // pred_check
          %p345 = pneg %p103
        $region54: #{mlp_network_forward.1} parent=47 // pred_check_branch
          %347 = sbr.rel (%p345) target = $region56
        $region55: #{mlp_network_forward.1} parent=47 // pred_region
          %p348 = scmp.lt.s32.totalorder %s29, 1
          %s349 = scalar_select %p348, %s29, 1
          %s350 = smul.addr %s349, 4
          %s351 = smul.addr %s350, 8
          %s352 = scalar_lea.vmem %s2, %s351
        $region56: #{mlp_network_forward.1} parent=47 // pred_fallthru
          _
      $region48: #{mlp_network_forward.1} parent=5 // pred_fallthru
        _
      %p353 = scmp.le.s32.totalorder 1, %s22
      %p354 = scmp.lt.s32.totalorder %s22, 3
      %p355 = pnand %p353, %p354
      %p356 = pneg %p355
      // Predicated region
      $region57: #{mlp_network_forward.1} parent=5 // pred_check
        _
      $region58: #{mlp_network_forward.1} parent=5 // pred_check_branch
        %358 = sbr.rel (%p355) target = $region60
      $region59: #{mlp_network_forward.1} parent=5 // pred_region
        %s359 = ssub.s32 %s22, 1
        // Predicated region
        $region61: #{mlp_network_forward.1} parent=59 // pred_check
          %p360 = pneg %p55
        $region62: #{mlp_network_forward.1} parent=59 // pred_check_branch
          %362 = sbr.rel (%p360) target = $region64
        $region63: #{mlp_network_forward.1} parent=59 // pred_region
          %363 = dma.done [#allocation5], 32
        $region64: #{mlp_network_forward.1} parent=59 // pred_fallthru
          _
        %364 = sfence
        %p365 = pneg %p55
        %p366 = pneg %p52
        %p367 = scmp.lt.s32.totalorder %s31, 1
        %s368 = scalar_select %p367, %s31, 1
        %p369 = scmp.lt.s32.totalorder %s32, 0
        %s370 = scalar_select %p369, %s32, 0
        %s371 = sadd.s32 %s370, %s368
        %s372 = smul.addr %s371, 2
        %s373 = scalar_lea.vmem %s1, %s372
        %p374 = pneg %p83
        %p375 = pneg %p80
        %p376 = scmp.lt.s32.totalorder %s31, 1
        %s377 = scalar_select %p376, %s31, 1
        %s378 = smul.addr %s377, 4
        %s379 = smul.addr %s378, 8
        %s380 = scalar_lea.vmem %s2, %s379
        %p381 = pneg %p109
        %p382 = pneg %p106
        %p383 = pneg %p130
        %p384 = pneg %p127
        %p385 = pneg %p151
        %p386 = pneg %p148
        %p387 = pneg %p172
        %p388 = pneg %p169
        %p389 = pneg %p193
        %p390 = pneg %p190
        %p391 = pneg %p214
        %p392 = pneg %p211
        %p393 = pneg %p235
        %p394 = pneg %p232
        %p395 = pneg %p256
        %p396 = pneg %p253
        %p397 = pneg %p284
        %p398 = pneg %p281
        %s399 = sand.u32 %s271, 1
        %s400 = scalar_lea.sflag [#allocation4], %s399
        %s401 = sand.u32 %s271, 1
        %s402 = scalar_lea.vmem [#allocation6], %s401
        %p403 = scmp.lt.s32.totalorder %s31, 1
        %s404 = scalar_select %p403, %s31, 1
        %p405 = scmp.lt.s32.totalorder %s32, 0
        %s406 = scalar_select %p405, %s32, 0
        %s407 = sadd.s32 %s406, %s404
        %s408 = smul.addr %s407, 2
        %s409 = scalar_lea.vmem %s1, %s408
        %p410 = scmp.lt.s32.totalorder %s31, 1
        %s411 = scalar_select %p410, %s31, 1
        %s412 = smul.addr %s411, 4
        %s413 = smul.addr %s412, 8
        %s414 = scalar_lea.vmem %s2, %s413
        %v416 = vld [vmem:[%s409] sm:$0x3]
        %v417 = vunpack.c.l.bf16 %v416
        %s418 = smul.u32 %s31, 128
        %s419 = sld [smem:[#allocation3 + %s418]]
        %s420 = sadd.s32 %s418, 1
        %s421 = sld [smem:[#allocation3 + %s420]]
        %vm422 = vcmask 1043456
        %v423 = vsel %vm422, %v417, 0.0
        %v424 = vrot.slane %v423, 4
        %v425 = vadd.f32 %v423, %v424
        %v426 = vrot.slane %v425, 2
        %v427 = vadd.f32 %v425, %v426
        %v428 = vrot.slane %v427, 1
        %v429 = vadd.f32 %v427, %v428
        %v430 = vmul.f32 %v417, %v417
        %v431 = vsel %vm422, %v430, 0.0
        %v432 = vrot.slane %v431, 4
        %v433 = vadd.f32 %v431, %v432
        %v434 = vrot.slane %v433, 2
        %v435 = vadd.f32 %v433, %v434
        %v436 = vrot.slane %v435, 1
        %v437 = vadd.f32 %v435, %v436
        %v438 = vstv %s419
        %v439 = vadd.f32 %v429, %v438
        %v440 = vmul.f32 %v439, 0.0625
        %v441 = vstv %s421
        %v442 = vadd.f32 %v437, %v441
        %v443 = vmul.f32 %v442, 0.0625
        %v444 = vmul.f32 %v440, %v440
        %v445 = vsub.f32 %v443, %v444
        %v446 = vadd.f32 %v445, 1e-05
        %v447 = vrsqrt.pop %v446
        %v448 = vmul.f32 %v440, %v447
        %v449 = vsub.f32 %v417, %v440
        %v450 = vmul.f32 %v449, %v447
        %v451 = vpack.c.bf16 %v450, %v450
        %v452 = vld [vmem:[%s3] sm:$0xf]
        %v453 = vld [vmem:[%s3 + $0x4] sm:$0xf]
        %v454 = vld [vmem:[%s3 + $0x8] sm:$0xf]
        %v455 = vld [vmem:[%s3 + $0xc] sm:$0xf]
        %v456 = vld [vmem:[%s414] sm:$0xff]
        %v457 = vld [vmem:[%s414 + $0x8] sm:$0xff]
        %v458 = vld [vmem:[%s414 + $0x10] sm:$0xff]
        %v459 = vld [vmem:[%s414 + $0x18] sm:$0xff]
        %461 = vset.pattern.permute.xlu0 0
        %462 = vperm.xlu0 %461, %v456
        %v463 = vpop.permute.xlu0 %462
        %466 = vset.pattern.permute.xlu0 0
        %467 = vperm.xlu0 %466, %v457
        %v468 = vpop.permute.xlu0 %467
        %471 = vset.pattern.permute.xlu0 0
        %472 = vperm.xlu0 %471, %v458
        %v473 = vpop.permute.xlu0 %472
        %476 = vset.pattern.permute.xlu0 0
        %477 = vperm.xlu0 %476, %v459
        %v478 = vpop.permute.xlu0 %477
        %v480 = vmul.f32 %v463, %v447
        %v481 = vmul.f32 %v468, %v447
        %v482 = vmul.f32 %v473, %v447
        %v483 = vmul.f32 %v478, %v447
        %v488 = vunpack.c.l.b16 %v452
        %v489 = vunpack.c.l.b16 %v453
        %v490 = vunpack.c.l.b16 %v454
        %v491 = vunpack.c.l.b16 %v455
        %v492 = vpack.c.b16 %v489, %v488
        %v493 = vpack.c.b16 %v491, %v490
        %vm494 = vcmask 31744
        %v496 = vsel %vm494, %v492, 0
        %v499 = vsel %vm494, %v493, 0
        %vm501 = vcmask 1041408
        %v503 = vsel %vm501, %v451, 0
        %505 = vmatprep.subr.bf16.mxu0 0
        %506 = vmatpush1.bf16.msra.mxu0 %v503
        %507 = vmatprep.subr.bf16.mxu0 0
        %508 = vmatpush1.bf16.msra.mxu0 0
        %509 = vmatprep.subr.bf16.mxu0 0
        %510 = vmatpush1.bf16.msra.mxu0 0
        %511 = vmatprep.subr.bf16.mxu0 0
        %512 = vmatpush1.bf16.msra.mxu0 0
        %513 = vmatprep.subr.bf16.mxu0 0
        %514 = vmatpush1.bf16.msra.mxu0 0
        %515 = vmatprep.subr.bf16.mxu0 0
        %516 = vmatpush1.bf16.msra.mxu0 0
        %517 = vmatprep.subr.bf16.mxu0 0
        %518 = vmatpush1.bf16.msra.mxu0 0
        %519 = vmatprep.subr.bf16.mxu0 0
        %520 = vmatpush1.bf16.msra.mxu0 0
        %521 = vmatprep.subr.bf16.mxu0 0
        %522 = vmatpush1.bf16.msra.mxu0 0
        %523 = vmatprep.subr.bf16.mxu0 0
        %524 = vmatpush1.bf16.msra.mxu0 0
        %525 = vmatprep.subr.bf16.mxu0 0
        %526 = vmatpush1.bf16.msra.mxu0 0
        %527 = vmatprep.subr.bf16.mxu0 0
        %528 = vmatpush1.bf16.msra.mxu0 0
        %529 = vmatprep.subr.bf16.mxu0 0
        %530 = vmatpush1.bf16.msra.mxu0 0
        %531 = vmatprep.subr.bf16.mxu0 0
        %532 = vmatpush1.bf16.msra.mxu0 0
        %533 = vmatprep.subr.bf16.mxu0 0
        %534 = vmatpush1.bf16.msra.mxu0 0
        %535 = vmatprep.subr.bf16.mxu0 0
        %536 = vmatpush1.bf16.msra.mxu0 0
        %537 = vmatprep.mubr.bf16.mxu0 0
        %538 = vmatmul.mubr.bf16.gmra.mrb[0].mxu0 %v496
        %v539 = vpop.f32.mrb[0].mxu0
        %v540 = vadd.f32 %v480, %v539
        %v541 = vpop.f32.mrb[0].mxu0
        %v542 = vpop.f32.mrb[0].mxu0
        %v543 = vadd.f32 %v481, %v542
        %v544 = vpop.f32.mrb[0].mxu0
        %545 = vmatprep.mubr.bf16.mxu0 0
        %546 = vmatmul.mubr.bf16.gmra.mrb[0].mxu0 %v499
        %v547 = vpop.f32.mrb[0].mxu0
        %v548 = vadd.f32 %v482, %v547
        %v549 = vpop.f32.mrb[0].mxu0
        %v550 = vpop.f32.mrb[0].mxu0
        %v551 = vadd.f32 %v483, %v550
        %v552 = vpop.f32.mrb[0].mxu0
        %553 = vdwg.mxu0
        %v554 = vld [vmem:[%s4] sm:$0xff]
        %v555 = vld [vmem:[%s4 + $0x8] sm:$0xff]
        %v556 = vld [vmem:[%s4 + $0x10] sm:$0xff]
        %v557 = vld [vmem:[%s4 + $0x18] sm:$0xff]
        %559 = vset.pattern.permute.xlu0 0
        %560 = vperm.xlu0 %559, %v554
        %v561 = vpop.permute.xlu0 %560
        %564 = vset.pattern.permute.xlu0 0
        %565 = vperm.xlu0 %564, %v555
        %v566 = vpop.permute.xlu0 %565
        %569 = vset.pattern.permute.xlu0 0
        %570 = vperm.xlu0 %569, %v556
        %v571 = vpop.permute.xlu0 %570
        %574 = vset.pattern.permute.xlu0 0
        %575 = vperm.xlu0 %574, %v557
        %v576 = vpop.permute.xlu0 %575
        %v578 = vmul.f32 %v561, %v448
        %v579 = vmul.f32 %v566, %v448
        %v580 = vmul.f32 %v571, %v448
        %v581 = vmul.f32 %v576, %v448
        %v582 = vsub.f32 %v540, %v578
        %v583 = vsub.f32 %v543, %v579
        %v584 = vsub.f32 %v548, %v580
        %v585 = vsub.f32 %v551, %v581
        %v586 = vld [vmem:[%s5] sm:$0xff]
        %v587 = vld [vmem:[%s5 + $0x8] sm:$0xff]
        %v588 = vld [vmem:[%s5 + $0x10] sm:$0xff]
        %v589 = vld [vmem:[%s5 + $0x18] sm:$0xff]
        %591 = vset.pattern.permute.xlu0 0
        %592 = vperm.xlu0 %591, %v586
        %v593 = vpop.permute.xlu0 %592
        %596 = vset.pattern.permute.xlu0 0
        %597 = vperm.xlu0 %596, %v587
        %v598 = vpop.permute.xlu0 %597
        %601 = vset.pattern.permute.xlu0 0
        %602 = vperm.xlu0 %601, %v588
        %v603 = vpop.permute.xlu0 %602
        %606 = vset.pattern.permute.xlu0 0
        %607 = vperm.xlu0 %606, %v589
        %v608 = vpop.permute.xlu0 %607
        %v610 = vadd.f32 %v582, %v593
        %v611 = vadd.f32 %v583, %v598
        %v612 = vadd.f32 %v584, %v603
        %v613 = vadd.f32 %v585, %v608
        %v614 = vmul.f32 %v610, 0.01
        %v615 = vmul.f32 %v611, 0.01
        %v616 = vmul.f32 %v612, 0.01
        %v617 = vmul.f32 %v613, 0.01
        %v618 = vmax.f32 %v610, %v614
        %v619 = vmax.f32 %v611, %v615
        %v620 = vmax.f32 %v612, %v616
        %v621 = vmax.f32 %v613, %v617
        %v622 = vld [vmem:[%s6] sm:$0xf]
        %v623 = vld [vmem:[%s6 + $0x4] sm:$0xf]
        %v624 = vld [vmem:[%s6 + $0x8] sm:$0xf]
        %v625 = vld [vmem:[%s6 + $0xc] sm:$0xf]
        %v626 = vpack.c.bf16 %v619, %v618
        %v627 = vpack.c.bf16 %v621, %v620
        %v628 = vld [vmem:[%s7] sm:$0xff]
        %v629 = vld [vmem:[%s7 + $0x8] sm:$0xff]
        %v630 = vld [vmem:[%s7 + $0x10] sm:$0xff]
        %v631 = vld [vmem:[%s7 + $0x18] sm:$0xff]
        %633 = vset.pattern.permute.xlu0 0
        %634 = vperm.xlu0 %633, %v628
        %v635 = vpop.permute.xlu0 %634
        %638 = vset.pattern.permute.xlu0 0
        %639 = vperm.xlu0 %638, %v629
        %v640 = vpop.permute.xlu0 %639
        %643 = vset.pattern.permute.xlu0 0
        %644 = vperm.xlu0 %643, %v630
        %v645 = vpop.permute.xlu0 %644
        %648 = vset.pattern.permute.xlu0 0
        %649 = vperm.xlu0 %648, %v631
        %v650 = vpop.permute.xlu0 %649
        %v656 = vunpack.c.l.b16 %v622
        %v657 = vunpack.c.l.b16 %v623
        %v658 = vunpack.c.l.b16 %v624
        %v659 = vunpack.c.l.b16 %v625
        %v660 = vpack.c.b16 %v657, %v656
        %v661 = vpack.c.b16 %v659, %v658
        %vm662 = vcmask 261120
        %v664 = vsel %vm662, %v660, 0
        %v667 = vsel %vm662, %v661, 0
        %669 = vmatprep.subr.bf16.mxu0 0
        %670 = vmatpush1.bf16.msra.mxu0 %v626
        %671 = vmatprep.subr.bf16.mxu0 0
        %672 = vmatpush1.bf16.msra.mxu0 %v627
        %673 = vmatprep.subr.bf16.mxu0 0
        %674 = vmatpush1.bf16.msra.mxu0 0
        %675 = vmatprep.subr.bf16.mxu0 0
        %676 = vmatpush1.bf16.msra.mxu0 0
        %677 = vmatprep.subr.bf16.mxu0 0
        %678 = vmatpush1.bf16.msra.mxu0 0
        %679 = vmatprep.subr.bf16.mxu0 0
        %680 = vmatpush1.bf16.msra.mxu0 0
        %681 = vmatprep.subr.bf16.mxu0 0
        %682 = vmatpush1.bf16.msra.mxu0 0
        %683 = vmatprep.subr.bf16.mxu0 0
        %684 = vmatpush1.bf16.msra.mxu0 0
        %685 = vmatprep.subr.bf16.mxu0 0
        %686 = vmatpush1.bf16.msra.mxu0 0
        %687 = vmatprep.subr.bf16.mxu0 0
        %688 = vmatpush1.bf16.msra.mxu0 0
        %689 = vmatprep.subr.bf16.mxu0 0
        %690 = vmatpush1.bf16.msra.mxu0 0
        %691 = vmatprep.subr.bf16.mxu0 0
        %692 = vmatpush1.bf16.msra.mxu0 0
        %693 = vmatprep.subr.bf16.mxu0 0
        %694 = vmatpush1.bf16.msra.mxu0 0
        %695 = vmatprep.subr.bf16.mxu0 0
        %696 = vmatpush1.bf16.msra.mxu0 0
        %697 = vmatprep.subr.bf16.mxu0 0
        %698 = vmatpush1.bf16.msra.mxu0 0
        %699 = vmatprep.subr.bf16.mxu0 0
        %700 = vmatpush1.bf16.msra.mxu0 0
        %701 = vmatprep.mubr.bf16.mxu0 0
        %702 = vmatmul.mubr.bf16.gmra.mrb[0].mxu0 %v664
        %v703 = vpop.f32.mrb[0].mxu0
        %v704 = vadd.f32 %v635, %v703
        %v705 = vpop.f32.mrb[0].mxu0
        %v706 = vpop.f32.mrb[0].mxu0
        %v707 = vadd.f32 %v640, %v706
        %v708 = vpop.f32.mrb[0].mxu0
        %709 = vmatprep.mubr.bf16.mxu0 0
        %710 = vmatmul.mubr.bf16.gmra.mrb[0].mxu0 %v667
        %v711 = vpop.f32.mrb[0].mxu0
        %v712 = vadd.f32 %v645, %v711
        %v713 = vpop.f32.mrb[0].mxu0
        %v714 = vpop.f32.mrb[0].mxu0
        %v715 = vadd.f32 %v650, %v714
        %v716 = vpop.f32.mrb[0].mxu0
        %717 = vdwg.mxu0
        %v718 = vmul.f32 %v704, 0.01
        %v719 = vmul.f32 %v707, 0.01
        %v720 = vmul.f32 %v712, 0.01
        %v721 = vmul.f32 %v715, 0.01
        %v722 = vmax.f32 %v704, %v718
        %v723 = vmax.f32 %v707, %v719
        %v724 = vmax.f32 %v712, %v720
        %v725 = vmax.f32 %v715, %v721
        %v726 = vld [vmem:[%s8] sm:$0xff]
        %v727 = vld [vmem:[%s8 + $0x8] sm:$0xff]
        %v728 = vld [vmem:[%s8 + $0x10] sm:$0xff]
        %v729 = vld [vmem:[%s8 + $0x18] sm:$0xff]
        %731 = vset.pattern.permute.xlu0 0
        %732 = vperm.xlu0 %731, %v726
        %v733 = vpop.permute.xlu0 %732
        %736 = vset.pattern.permute.xlu0 0
        %737 = vperm.xlu0 %736, %v727
        %v738 = vpop.permute.xlu0 %737
        %741 = vset.pattern.permute.xlu0 0
        %742 = vperm.xlu0 %741, %v728
        %v743 = vpop.permute.xlu0 %742
        %746 = vset.pattern.permute.xlu0 0
        %747 = vperm.xlu0 %746, %v729
        %v748 = vpop.permute.xlu0 %747
        %v750 = vmul.f32 %v722, %v733
        %v751 = vmul.f32 %v723, %v738
        %v752 = vmul.f32 %v724, %v743
        %v753 = vmul.f32 %v725, %v748
        %v754 = vadd.f32 %v750, %v751
        %v755 = vadd.f32 %v754, %v752
        %v756 = vadd.f32 %v755, %v753
        %v757 = vrot.slane %v756, 4
        %v758 = vadd.f32 %v756, %v757
        %v759 = vrot.slane %v758, 2
        %v760 = vadd.f32 %v758, %v759
        %v761 = vrot.slane %v760, 1
        %v762 = vadd.f32 %v760, %v761
        %v763 = vld [vmem:[#allocation2] sm:$0x1]
        %765 = vset.pattern.permute.xlu0 0
        %766 = vperm.xlu0 %765, %v763
        %v767 = vpop.permute.xlu0 %766
        %v769 = vlaneseq
        %v770 = vshrl.u32 %v769, 7
        %v771 = vsub.s32 0, %v770
        %v772 = vrot.slane %v767, %v771
        %v773 = vadd.f32 %v762, %v772
        %v774 = vtanh.pop %v773
        %775 = vst [vmem:[%s402] sm:$0x1] %v774
        %s776 = sand.u32 %s271, 1
        %s777 = scalar_lea.sflag [#allocation4], %s776
        %s778 = sand.u32 %s271, 1
        %s779 = scalar_lea.vmem [#allocation6], %s778
        // Predicated region
        $region65: #{mlp_network_forward.1} parent=59 // pred_check
          %p780 = pneg %p281
        $region66: #{mlp_network_forward.1} parent=59 // pred_check_branch
          %782 = sbr.rel (%p780) target = $region68
        $region67: #{mlp_network_forward.1} parent=59 // pred_region
          %s784 = ssub.s32 16, 16
          %785 = vsyncadd %s777, %s784
          %s786 = sadd.s32 %s32, %s31
          %s787 = smul.addr %s786, 16
          %s788 = scalar_lea.hbm %s10, %s787
          %s790 = sshll.u32 %s779, 4
          %s791 = int_to_ptr.vmem [resolvable:$true] %s790
          %793 = dma.vmem_to_hbm [thread:$0]  %s791, 16, %s788, %s777
        $region68: #{mlp_network_forward.1} parent=59 // pred_fallthru
          _
      $region60: #{mlp_network_forward.1} parent=5 // pred_fallthru
        _
      %p794 = scmp.le.s32.totalorder 2, %s22
      // Predicated region
      $region69: #{mlp_network_forward.1} parent=5 // pred_check
        %p795 = pneg %p794
      $region70: #{mlp_network_forward.1} parent=5 // pred_check_branch
        %797 = sbr.rel (%p795) target = $region72
      $region71: #{mlp_network_forward.1} parent=5 // pred_region
        %s798 = ssub.s32 %s22, 2
        // Predicated region
        $region73: #{mlp_network_forward.1} parent=71 // pred_check
          %p799 = pneg %p287
        $region74: #{mlp_network_forward.1} parent=71 // pred_check_branch
          %801 = sbr.rel (%p799) target = $region76
        $region75: #{mlp_network_forward.1} parent=71 // pred_region
          %s802 = sand.u32 %s272, 1
          %s803 = scalar_lea.sflag [#allocation4], %s802
          %s804 = sand.u32 %s272, 1
          %s805 = scalar_lea.vmem [#allocation6], %s804
          %806 = dma.done %s803, 16
        $region76: #{mlp_network_forward.1} parent=71 // pred_fallthru
          _
      $region72: #{mlp_network_forward.1} parent=5 // pred_fallthru
        _
    $region6: #{mlp_network_forward.1} parent=1 // loop_footer
      %s26 = sadd.s32 1, %s22
    $region7: #{mlp_network_forward.1} parent=1 // loop_footer_branch
      %21 = sbr.rel target = $region3
    $region8: #{mlp_network_forward.1} parent=1 // loop_exit
      _
    %807 = vsyncpa [#allocation4], 1
    %s808 = scalar_lea.sflag [#allocation4], 1
    %809 = vsyncpa %s808, 1
    %810 = vsyncpa [#allocation5], 1
    %s811 = scalar_lea.sflag [#allocation5], 1
    %812 = vsyncpa %s811, 1

</llo_original>
